<compile_context>
chip_gen: v5e
topology: v5e:2x2
jax: 0.10.0
libtpu: 0.0.40
codegen_flags: <defaults>
</compile_context>

<pallas_src>
import functools

import numpy as np
import jax
import jax.numpy as jnp
from jax.experimental import pallas as pl
from jax.experimental.pallas import tpu as pltpu


def _round_up(x, m):
    return (x + m - 1) // m * m


def decoder_kernel(enc_flat_ref, hid_ref, dec_in_ref, w_ref, out_ref,
                   *, B, S, E, D, O):
    # Static row offsets into the packed weight slab (all multiples of 8).
    r_w1 = 0
    r_w2 = E
    r_b = 2 * E          # bias block: [b1+b2 ; V ; gru biases ; b_fc ; pad]
    r_wih = 2 * E + 8
    r_wfc = r_wih + E + O

    enc_flat = enc_flat_ref[...]                                   # (B*S, E)

    # ---- Bahdanau attention ----
    # pre = enc @ W1 + broadcast_S(hid @ W2) + (b1 + b2)
    pre_enc = jnp.dot(enc_flat, w_ref[r_w1:r_w1 + E, :D],
                      preferred_element_type=jnp.float32)          # (B*S, D)
    pre_hid = jnp.dot(hid_ref[...], w_ref[r_w2:r_w2 + E, :D],
                      preferred_element_type=jnp.float32)          # (B, D)
    b12 = w_ref[r_b:r_b + 1, :D]                                   # (1, D)
    v_w = w_ref[r_b + 1:r_b + 2, :D]                               # (1, D)

    score = jnp.tanh(pre_enc.reshape(B, S, D)
                     + pre_hid[:, None, :] + b12)                  # (B, S, D)

    # V(score): lane reduce over D; V's bias cancels in the softmax.
    logits = jnp.sum(score * v_w, axis=-1, keepdims=True)          # (B, S, 1)

    # softmax over the sequence (sublane) axis
    m = jnp.max(logits, axis=1, keepdims=True)
    e = jnp.exp(logits - m)
    attn = e / jnp.sum(e, axis=1, keepdims=True)                   # (B, S, 1)

    # context reduction on VPU + XLU sublane reduce (no degenerate MXU matvec)
    enc_b = enc_flat.reshape(B, S, E)
    context = jnp.sum(attn * enc_b, axis=1)                        # (B, E)

    # ---- single GRU step (h0 == 0 -> W_hh @ h vanishes, hidden biases remain)
    gru_in = jnp.concatenate([context, dec_in_ref[...]], axis=-1)  # (B, E+O)
    w_ih = w_ref[r_wih:r_wih + E + O, :3 * D]                      # (E+O, 3D)
    b_gru = w_ref[r_b + 2:r_b + 3, :4 * D]                         # (1, 4D)

    gi = (jnp.dot(gru_in, w_ih, preferred_element_type=jnp.float32)
          + b_gru[:, :3 * D])                                      # (B, 3D)
    r = jax.nn.sigmoid(gi[:, :D])
    z = jax.nn.sigmoid(gi[:, D:2 * D])
    n = jnp.tanh(gi[:, 2 * D:] + r * b_gru[:, 3 * D:4 * D])
    h = (1.0 - z) * n                                              # + z * h0, h0 == 0

    # ---- output projection (fc) + direct stores into one output slab ----
    x = (jnp.dot(h, w_ref[r_wfc:r_wfc + D, :O],
                 preferred_element_type=jnp.float32)
         + w_ref[r_b + 3:r_b + 4, :O])                             # (B, O)
    out_ref[:, :O] = x
    out_ref[:, O:] = h


def init_params(key, output_dim, dec_units, enc_units):
    """Deterministic synthetic init (uniform, PyTorch-like fan-in bounds)."""
    E, D, O = enc_units, dec_units, output_dim
    ks = jax.random.split(key, 11)

    def u(k, shape, fan_in):
        b = 1.0 / np.sqrt(fan_in)
        return jax.random.uniform(k, shape, jnp.float32, -b, b)

    return dict(
        w1=u(ks[0], (E, D), E), b1=u(ks[1], (1, D), E),
        w2=u(ks[2], (E, D), E), b2=u(ks[3], (1, D), E),
        v=u(ks[4], (1, D), D), bv=u(ks[5], (1, 1), D),
        # GRU input weights, stored (in_features, 3*D) with gate order [r|z|n];
        # rows 0:E multiply the context part, rows E:E+O the dec_input part
        # (matching torch.cat((context, dec_input), -1)).
        w_ih=u(ks[6], (E + O, 3 * D), D),
        b_ih=u(ks[7], (1, 3 * D), D),
        b_hh=u(ks[8], (1, 3 * D), D),
        wfc=u(ks[9], (D, O), D), bfc=u(ks[10], (1, O), D),
    )


def pack_weights(params):
    """Pack all loop-invariant weights/biases into one 128-lane f32 slab.

    Built ONCE outside any decode loop; the kernel slices it with static
    sublane-aligned views, so only a single weight DMA is issued per call.
    Layout (rows):
      [0,   E)        W1                      (cols 0:D)
      [E,  2E)        W2                      (cols 0:D)
      [2E, 2E+8)      bias block:
          row 2E      b1 + b2                 (cols 0:D)
          row 2E+1    V weight                (cols 0:D)
          row 2E+2    [b_ir+b_hr|b_iz+b_hz|b_in|b_hn]   (cols 0:4D)
          row 2E+3    b_fc                    (cols 0:O)
      [2E+8, 2E+8+E+O)   W_ih                 (cols 0:3D)
      [.., .. + D)       W_fc                 (cols 0:O)
    """
    E, D = params["w1"].shape
    O = params["wfc"].shape[1]
    lanes = _round_up(max(4 * D, 3 * D, D, O, 1), 128)
    rows = _round_up(2 * E + 8 + (E + O) + D, 8)

    b_gru = jnp.concatenate(
        [params["b_ih"][:, :2 * D] + params["b_hh"][:, :2 * D],
         params["b_ih"][:, 2 * D:], params["b_hh"][:, 2 * D:]], axis=-1)

    slab = jnp.zeros((rows, lanes), jnp.float32)
    r = 0
    slab = slab.at[r:r + E, :D].set(params["w1"]); r += E
    slab = slab.at[r:r + E, :D].set(params["w2"]); r += E
    slab = slab.at[r, :D].set(params["b1"][0] + params["b2"][0])
    slab = slab.at[r + 1, :D].set(params["v"][0])
    slab = slab.at[r + 2, :4 * D].set(b_gru[0])
    slab = slab.at[r + 3, :O].set(params["bfc"][0])
    r += 8
    slab = slab.at[r:r + E + O, :3 * D].set(params["w_ih"]); r += E + O
    slab = slab.at[r:r + D, :O].set(params["wfc"])
    return slab


@functools.partial(jax.jit, static_argnames=("dec_units",))
def decoder_forward(dec_input, enc_hidden, enc_output, weight_slab, *, dec_units):
    # PyTorch calling convention:
    #   dec_input (B, 1, O), enc_hidden (1, B, E), enc_output (S, B, E)
    S, B, E = enc_output.shape
    O = dec_input.shape[-1]
    D = dec_units

    # Minimal wrapper-side layout plumbing (enc_output shipped exactly once).
    enc_flat = jnp.transpose(enc_output, (1, 0, 2)).reshape(B * S, E)  # (B*S, E)
    hid = enc_hidden[0]                                                # (B, E)
    dec_in = dec_input[:, 0, :]                                        # (B, O)

    kernel = functools.partial(decoder_kernel, B=B, S=S, E=E, D=D, O=O)
    vmem = pl.BlockSpec(memory_space=pltpu.MemorySpace.VMEM)
    out = pl.pallas_call(
        kernel,
        out_shape=jax.ShapeDtypeStruct((B, O + D), jnp.float32),
        in_specs=[vmem, vmem, vmem, vmem],
        out_specs=vmem,
    )(enc_flat, hid, dec_in, weight_slab)

    x = out[:, :O]
    state = out[:, O:]
    return x, state[None, :, :]          # state -> (1, B, D) like PyTorch


def reference_numpy(dec_input, enc_hidden, enc_output, params):
    """Pure-numpy (float64) reference mirroring the PyTorch forward."""
    p = {k: np.asarray(v, np.float64) for k, v in params.items()}
    enc_out = np.transpose(np.asarray(enc_output, np.float64), (1, 0, 2))  # (B,S,E)
    hid = np.transpose(np.asarray(enc_hidden, np.float64), (1, 0, 2))      # (B,1,E)
    dec_in = np.asarray(dec_input, np.float64)                             # (B,1,O)
    D = p["w1"].shape[1]

    score = np.tanh(enc_out @ p["w1"] + p["b1"] + hid @ p["w2"] + p["b2"])
    logits = np.sum(score * p["v"], axis=-1, keepdims=True) + p["bv"]      # (B,S,1)
    ex = np.exp(logits - logits.max(axis=1, keepdims=True))
    attn = ex / ex.sum(axis=1, keepdims=True)
    context = np.sum(attn * enc_out, axis=1)                               # (B,E)

    x_in = np.concatenate([context[:, None, :], dec_in], axis=-1)[:, 0, :]  # (B,E+O)
    gi = x_in @ p["w_ih"] + p["b_ih"]
    gh = p["b_hh"]  # h0 == 0
    r = 1.0 / (1.0 + np.exp(-(gi[:, :D] + gh[:, :D])))
    z = 1.0 / (1.0 + np.exp(-(gi[:, D:2 * D] + gh[:, D:2 * D])))
    n = np.tanh(gi[:, 2 * D:] + r * gh[:, 2 * D:])
    h = (1.0 - z) * n
    x = h @ p["wfc"] + p["bfc"]
    return x, h[None]


if __name__ == "__main__":
    B, S, E, D, O = 2, 8, 32, 32, 16   # batch, enc seq len, enc_units, dec_units, output_dim
    key = jax.random.PRNGKey(0)
    kp, k1, k2, k3 = jax.random.split(key, 4)

    params = init_params(kp, output_dim=O, dec_units=D, enc_units=E)
    weight_slab = pack_weights(params)   # built once, reused across decode steps

    dec_input = jax.random.normal(k1, (B, 1, O), jnp.float32)    # (batch, 1, output_dim)
    enc_hidden = jax.random.normal(k2, (1, B, E), jnp.float32)   # (1, batch, enc_units)
    enc_output = jax.random.normal(k3, (S, B, E), jnp.float32)   # (seq, batch, enc_units)

    x, state = decoder_forward(dec_input, enc_hidden, enc_output, weight_slab,
                               dec_units=D)
    x = jax.block_until_ready(x)
    state = jax.block_until_ready(state)

    x_ref, state_ref = reference_numpy(dec_input, enc_hidden, enc_output, params)
    assert x.shape == (B, O) and state.shape == (1, B, D)
    assert np.allclose(np.asarray(x), x_ref, atol=1e-3, rtol=1e-3), \
        float(np.abs(np.asarray(x) - x_ref).max())
    assert np.allclose(np.asarray(state), state_ref, atol=1e-3, rtol=1e-3), \
        float(np.abs(np.asarray(state) - state_ref).max())
    print("KERNEL_OK")
</pallas_src>

<mosaic_0001>
module attributes {stable_mosaic.version = 11 : i64} {
  func.func @decoder_kernel(%arg0: memref<16x32xf32, #tpu.memory_space<vmem>>, %arg1: memref<2x32xf32, #tpu.memory_space<vmem>>, %arg2: memref<2x16xf32, #tpu.memory_space<vmem>>, %arg3: memref<152x128xf32, #tpu.memory_space<vmem>>, %arg4: memref<2x48xf32, #tpu.memory_space<vmem>>) attributes {dimension_semantics = [], scalar_prefetch = 0 : i64, scratch_operands = 0 : i64, tpu.core_type = #tpu.core_type<tc>} {
    %c0 = arith.constant 0 : index
    %c0_0 = arith.constant 0 : index
    %0 = vector.load %arg0[%c0, %c0_0] : memref<16x32xf32, #tpu.memory_space<vmem>>, vector<16x32xf32>
    %c0_1 = arith.constant 0 : index
    %c0_2 = arith.constant 0 : index
    %1 = vector.load %arg3[%c0_1, %c0_2] : memref<152x128xf32, #tpu.memory_space<vmem>>, vector<32x32xf32>
    %cst = arith.constant dense<0.000000e+00> : vector<16x32xf32>
    %2 = tpu.matmul %0, %1, %cst {dimension_numbers = #tpu.dot_dimension_numbers<[1], [0], [0], [1], [0, 0, 1, 1], [], []>} : vector<16x32xf32>, vector<32x32xf32>, vector<16x32xf32> -> vector<16x32xf32>
    %c0_3 = arith.constant 0 : index
    %c0_4 = arith.constant 0 : index
    %3 = vector.load %arg1[%c0_3, %c0_4] : memref<2x32xf32, #tpu.memory_space<vmem>>, vector<2x32xf32>
    %c32 = arith.constant 32 : index
    %c0_5 = arith.constant 0 : index
    %4 = vector.load %arg3[%c32, %c0_5] : memref<152x128xf32, #tpu.memory_space<vmem>>, vector<32x32xf32>
    %cst_6 = arith.constant dense<0.000000e+00> : vector<2x32xf32>
    %5 = tpu.matmul %3, %4, %cst_6 {dimension_numbers = #tpu.dot_dimension_numbers<[1], [0], [0], [1], [0, 0, 1, 1], [], []>} : vector<2x32xf32>, vector<32x32xf32>, vector<2x32xf32> -> vector<2x32xf32>
    %c64 = arith.constant 64 : index
    %c0_7 = arith.constant 0 : index
    %6 = vector.load %arg3[%c64, %c0_7] : memref<152x128xf32, #tpu.memory_space<vmem>>, vector<1x32xf32>
    %c65 = arith.constant 65 : index
    %c0_8 = arith.constant 0 : index
    %7 = vector.load %arg3[%c65, %c0_8] : memref<152x128xf32, #tpu.memory_space<vmem>>, vector<1x32xf32>
    %8 = vector.shape_cast %2 : vector<16x32xf32> to vector<2x8x32xf32>
    %9 = vector.shape_cast %5 : vector<2x32xf32> to vector<2x1x32xf32>
    %10 = vector.broadcast %9 : vector<2x1x32xf32> to vector<2x8x32xf32>
    %11 = arith.addf %8, %10 : vector<2x8x32xf32>
    %12 = vector.shape_cast %6 : vector<1x32xf32> to vector<1x1x32xf32>
    %13 = vector.broadcast %12 : vector<1x1x32xf32> to vector<2x8x32xf32>
    %14 = arith.addf %11, %13 : vector<2x8x32xf32>
    %15 = math.tanh %14 : vector<2x8x32xf32>
    %16 = vector.shape_cast %7 : vector<1x32xf32> to vector<1x1x32xf32>
    %17 = vector.broadcast %16 : vector<1x1x32xf32> to vector<2x8x32xf32>
    %18 = arith.mulf %15, %17 : vector<2x8x32xf32>
    %cst_9 = arith.constant dense<0.000000e+00> : vector<2x8xf32>
    %19 = vector.multi_reduction <add>, %18, %cst_9 [2] : vector<2x8x32xf32> to vector<2x8xf32>
    %20 = vector.shape_cast %19 : vector<2x8xf32> to vector<2x8x1xf32>
    %cst_10 = arith.constant dense<0xFF800000> : vector<2x1xf32>
    %21 = vector.multi_reduction <maximumf>, %20, %cst_10 [1] : vector<2x8x1xf32> to vector<2x1xf32>
    %22 = vector.shape_cast %21 : vector<2x1xf32> to vector<2x1x1xf32>
    %23 = vector.broadcast %22 : vector<2x1x1xf32> to vector<2x8x1xf32>
    %24 = arith.subf %20, %23 : vector<2x8x1xf32>
    %25 = math.exp %24 : vector<2x8x1xf32>
    %cst_11 = arith.constant dense<0.000000e+00> : vector<2x1xf32>
    %26 = vector.multi_reduction <add>, %25, %cst_11 [1] : vector<2x8x1xf32> to vector<2x1xf32>
    %27 = vector.shape_cast %26 : vector<2x1xf32> to vector<2x1x1xf32>
    %28 = vector.broadcast %27 : vector<2x1x1xf32> to vector<2x8x1xf32>
    %29 = arith.divf %25, %28 : vector<2x8x1xf32>
    %30 = vector.shape_cast %0 : vector<16x32xf32> to vector<2x8x32xf32>
    %31 = vector.broadcast %29 : vector<2x8x1xf32> to vector<2x8x32xf32>
    %32 = arith.mulf %31, %30 : vector<2x8x32xf32>
    %cst_12 = arith.constant dense<0.000000e+00> : vector<2x32xf32>
    %33 = vector.multi_reduction <add>, %32, %cst_12 [1] : vector<2x8x32xf32> to vector<2x32xf32>
    %c0_13 = arith.constant 0 : index
    %c0_14 = arith.constant 0 : index
    %34 = vector.load %arg2[%c0_13, %c0_14] : memref<2x16xf32, #tpu.memory_space<vmem>>, vector<2x16xf32>
    %35 = tpu.concatenate %33, %34 in 1 : vector<2x32xf32>, vector<2x16xf32> -> vector<2x48xf32>
    %c72 = arith.constant 72 : index
    %c0_15 = arith.constant 0 : index
    %36 = vector.load %arg3[%c72, %c0_15] : memref<152x128xf32, #tpu.memory_space<vmem>>, vector<48x96xf32>
    %c66 = arith.constant 66 : index
    %c0_16 = arith.constant 0 : index
    %37 = vector.load %arg3[%c66, %c0_16] : memref<152x128xf32, #tpu.memory_space<vmem>>, vector<1x128xf32>
    %cst_17 = arith.constant dense<0.000000e+00> : vector<2x96xf32>
    %38 = tpu.matmul %35, %36, %cst_17 {dimension_numbers = #tpu.dot_dimension_numbers<[1], [0], [0], [1], [0, 0, 1, 1], [], []>} : vector<2x48xf32>, vector<48x96xf32>, vector<2x96xf32> -> vector<2x96xf32>
    %39 = vector.extract_strided_slice %37 {offsets = [0, 0], sizes = [1, 96], strides = [1, 1]} : vector<1x128xf32> to vector<1x96xf32>
    %40 = vector.broadcast %39 : vector<1x96xf32> to vector<2x96xf32>
    %41 = arith.addf %38, %40 : vector<2x96xf32>
    %42 = vector.extract_strided_slice %41 {offsets = [0, 0], sizes = [2, 32], strides = [1, 1]} : vector<2x96xf32> to vector<2x32xf32>
    %43 = arith.negf %42 : vector<2x32xf32>
    %44 = math.exp %43 : vector<2x32xf32>
    %cst_18 = arith.constant 1.000000e+00 : f32
    %45 = vector.broadcast %cst_18 : f32 to vector<2x32xf32>
    %46 = arith.addf %45, %44 : vector<2x32xf32>
    %47 = arith.divf %45, %46 : vector<2x32xf32>
    %48 = vector.extract_strided_slice %41 {offsets = [0, 32], sizes = [2, 32], strides = [1, 1]} : vector<2x96xf32> to vector<2x32xf32>
    %49 = arith.negf %48 : vector<2x32xf32>
    %50 = math.exp %49 : vector<2x32xf32>
    %cst_19 = arith.constant 1.000000e+00 : f32
    %51 = vector.broadcast %cst_19 : f32 to vector<2x32xf32>
    %52 = arith.addf %51, %50 : vector<2x32xf32>
    %53 = arith.divf %51, %52 : vector<2x32xf32>
    %54 = vector.extract_strided_slice %41 {offsets = [0, 64], sizes = [2, 32], strides = [1, 1]} : vector<2x96xf32> to vector<2x32xf32>
    %55 = vector.extract_strided_slice %37 {offsets = [0, 96], sizes = [1, 32], strides = [1, 1]} : vector<1x128xf32> to vector<1x32xf32>
    %56 = vector.broadcast %55 : vector<1x32xf32> to vector<2x32xf32>
    %57 = arith.mulf %47, %56 : vector<2x32xf32>
    %58 = arith.addf %54, %57 : vector<2x32xf32>
    %59 = math.tanh %58 : vector<2x32xf32>
    %cst_20 = arith.constant 1.000000e+00 : f32
    %60 = vector.broadcast %cst_20 : f32 to vector<2x32xf32>
    %61 = arith.subf %60, %53 : vector<2x32xf32>
    %62 = arith.mulf %61, %59 : vector<2x32xf32>
    %c120 = arith.constant 120 : index
    %c0_21 = arith.constant 0 : index
    %63 = vector.load %arg3[%c120, %c0_21] : memref<152x128xf32, #tpu.memory_space<vmem>>, vector<32x16xf32>
    %cst_22 = arith.constant dense<0.000000e+00> : vector<2x16xf32>
    %64 = tpu.matmul %62, %63, %cst_22 {dimension_numbers = #tpu.dot_dimension_numbers<[1], [0], [0], [1], [0, 0, 1, 1], [], []>} : vector<2x32xf32>, vector<32x16xf32>, vector<2x16xf32> -> vector<2x16xf32>
    %c67 = arith.constant 67 : index
    %c0_23 = arith.constant 0 : index
    %65 = vector.load %arg3[%c67, %c0_23] : memref<152x128xf32, #tpu.memory_space<vmem>>, vector<1x16xf32>
    %66 = vector.broadcast %65 : vector<1x16xf32> to vector<2x16xf32>
    %67 = arith.addf %64, %66 : vector<2x16xf32>
    %c0_24 = arith.constant 0 : index
    %c0_25 = arith.constant 0 : index
    %68 = vector.load %arg4[%c0_24, %c0_25] : memref<2x48xf32, #tpu.memory_space<vmem>>, vector<2x16xf32>
    tpu.vector_store %arg4[%c0_24, %c0_25], %67 {strides = array<i32>} : memref<2x48xf32, #tpu.memory_space<vmem>>, vector<2x16xf32>,
    %c0_26 = arith.constant 0 : index
    %c16 = arith.constant 16 : index
    %69 = vector.load %arg4[%c0_26, %c16] : memref<2x48xf32, #tpu.memory_space<vmem>>, vector<2x32xf32>
    tpu.vector_store %arg4[%c0_26, %c16], %62 {strides = array<i32>} : memref<2x48xf32, #tpu.memory_space<vmem>>, vector<2x32xf32>,
    return
  }
}

</mosaic_0001>

<llo_original>
// kernel: decoder_forward.1
$region0: #{decoder_forward.1}
  #allocation0 [shape = 'u32[]', space=smem, size = 0x4, offset = 0x4, fixed_abs, tag = 'smem constant byte address 0x4 - core index']
  #allocation1 [shape = 'u32[72,128]{1,0:T(1,128)}', space=vmem, size = 0x9000, scoped, tag = 'internal scratch']
  %s0 = inlined_call_operand.vmem [shape: f32[16,32], index: 0, kind: input, shape index: {}]
  %s1 = inlined_call_operand.vmem [shape: f32[2,32], index: 1, kind: input, shape index: {}]
  %s2 = inlined_call_operand.vmem [shape: f32[2,16], index: 2, kind: input, shape index: {}]
  %s3 = inlined_call_operand.hbm [shape: f32[152,128], index: 3, kind: input, shape index: {}]
  %s4 = inlined_call_operand.vmem [shape: f32[2,48], index: 4, kind: output, shape index: {}]
  %s5 = sld [smem:[#allocation0]]
  $region30: #{decoder_forward.1} parent=0
    _
  %s7 = ssub.s32 1, %s5
  %s8 = scalar_select 0, %s7, %s5
  $region1: #{decoder_forward.1} parent=0
    #allocation2 [shape = 'u8[77824]{0}', space=vmem, size = 0x13000, scoped, tag = 'input window, operand 3, single buffered']
    #allocation3 [shape = 's32[1]{0}', space=sflag, size = 0x4, scoped, tag = 'scoped memory for decoder_forward.1']
    %9 = vsyncpa [#allocation3], 0
    // Predicated region
    $region2: #{decoder_forward.1} parent=1 // pred_check
      _
    $region3: #{decoder_forward.1} parent=1 // pred_check_branch
      %11 = sbr.rel (0) target = $region5
    $region4: #{decoder_forward.1} parent=1 // pred_region
      _
    $region5: #{decoder_forward.1} parent=1 // pred_fallthru
      _
    // Predicated region
    $region6: #{decoder_forward.1} parent=1 // pred_check
      _
    $region7: #{decoder_forward.1} parent=1 // pred_check_branch
      %13 = sbr.rel (0) target = $region9
    $region8: #{decoder_forward.1} parent=1 // pred_region
      _
    $region9: #{decoder_forward.1} parent=1 // pred_fallthru
      _
    // Predicated region
    $region10: #{decoder_forward.1} parent=1 // pred_check
      _
    $region11: #{decoder_forward.1} parent=1 // pred_check_branch
      %15 = sbr.rel (0) target = $region13
    $region12: #{decoder_forward.1} parent=1 // pred_region
      _
    $region13: #{decoder_forward.1} parent=1 // pred_fallthru
      _
    // Predicated region
    $region14: #{decoder_forward.1} parent=1 // pred_check
      _
    $region15: #{decoder_forward.1} parent=1 // pred_check_branch
      %17 = sbr.rel (0) target = $region17
    $region16: #{decoder_forward.1} parent=1 // pred_region
      %19 = vsyncadd [#allocation3], 0
      %s20 = sshll.u32 %s3, 4
      %s21 = int_to_ptr.hbm [resolvable:$true] %s20
      %s22 = sshll.u32 [#allocation2], 4
      %s23 = int_to_ptr.vmem [resolvable:$true] %s22
      %28 = dma.hbm_to_vmem [thread:$0]  %s21, 2432, %s23, [#allocation3], 128, 128, 8
    $region17: #{decoder_forward.1} parent=1 // pred_fallthru
      _
    // Predicated region
    $region18: #{decoder_forward.1} parent=1 // pred_check
      _
    $region19: #{decoder_forward.1} parent=1 // pred_check_branch
      %30 = sbr.rel (0) target = $region21
    $region20: #{decoder_forward.1} parent=1 // pred_region
      %32 = dma.done [#allocation3], 2432
    $region21: #{decoder_forward.1} parent=1 // pred_fallthru
      _
    %v33 = vld [vmem:[%s0] sm:$0xff]
    %v34 = vld [vmem:[%s0 + $0x8] sm:$0xff]
    %v35 = vld [vmem:[#allocation2] sm:$0xff]
    %v36 = vld [vmem:[#allocation2 + $0x8] sm:$0xff]
    %v37 = vld [vmem:[#allocation2 + $0x10] sm:$0xff]
    %v38 = vld [vmem:[#allocation2 + $0x18] sm:$0xff]
    %vm39 = vcmask 261120
    %v41 = vsel %vm39, %v33, 0
    %v44 = vsel %vm39, %v34, 0
    %46 = vmatpush.msra.mxu0 0.0
    %47 = vmatpush.msra.mxu0 0.0
    %48 = vmatpush.msra.mxu0 0.0
    %49 = vmatpush.msra.mxu0 0.0
    %50 = vmatpush.msra.mxu0 0.0
    %51 = vmatpush.msra.mxu0 0.0
    %52 = vmatpush.msra.mxu0 0.0
    %53 = vmatpush.msra.mxu0 0.0
    %54 = vmatpush.msra.mxu0 0.0
    %55 = vmatpush.msra.mxu0 0.0
    %56 = vmatpush.msra.mxu0 0.0
    %57 = vmatpush.msra.mxu0 0.0
    %58 = vmatpush.msra.mxu0 %v38
    %59 = vmatpush.msra.mxu0 %v37
    %60 = vmatpush.msra.mxu0 %v36
    %61 = vmatpush.msra.mxu0 %v35
    %62 = vmatmul.f32.gmra.mxu0 %v41
    %v63 = vpop.f32.mrf.mxu0
    %v64 = vadd.f32 0.0, %v63
    %65 = vmatmul.f32.gmra.mxu0 %v44
    %v66 = vpop.f32.mrf.mxu0
    %v67 = vadd.f32 0.0, %v66
    %68 = vdwg.mxu0
    %v69 = vld [vmem:[%s1] sm:$0x3]
    %v70 = vld [vmem:[#allocation2 + $0x20] sm:$0xff]
    %v71 = vld [vmem:[#allocation2 + $0x28] sm:$0xff]
    %v72 = vld [vmem:[#allocation2 + $0x30] sm:$0xff]
    %v73 = vld [vmem:[#allocation2 + $0x38] sm:$0xff]
    %v75 = vsel %vm39, %v69, 0
    %77 = vmatpush.msra.mxu0 0.0
    %78 = vmatpush.msra.mxu0 0.0
    %79 = vmatpush.msra.mxu0 0.0
    %80 = vmatpush.msra.mxu0 0.0
    %81 = vmatpush.msra.mxu0 0.0
    %82 = vmatpush.msra.mxu0 0.0
    %83 = vmatpush.msra.mxu0 0.0
    %84 = vmatpush.msra.mxu0 0.0
    %85 = vmatpush.msra.mxu0 0.0
    %86 = vmatpush.msra.mxu0 0.0
    %87 = vmatpush.msra.mxu0 0.0
    %88 = vmatpush.msra.mxu0 0.0
    %89 = vmatpush.msra.mxu0 %v73
    %90 = vmatpush.msra.mxu0 %v72
    %91 = vmatpush.msra.mxu0 %v71
    %92 = vmatpush.msra.mxu0 %v70
    %93 = vmatmul.f32.gmra.mxu0 %v75
    %v94 = vpop.f32.mrf.mxu0
    %v95 = vadd.f32 0.0, %v94
    %96 = vdwg.mxu0
    %v97 = vld [vmem:[#allocation2 + $0x40] sm:$0x1]
    %v98 = vld [vmem:[#allocation2 + $0x41] sm:$0x1]
    %v100 = vrot.slane %v95, 1
    %v101 = vperm.slane %v95, 0
    %v102 = vperm.slane %v100, 0
    %v105 = vadd.f32 %v64, %v101
    %v106 = vadd.f32 %v67, %v102
    %v107 = vperm.slane %v97, 0
    %v108 = vadd.f32 %v105, %v107
    %v109 = vadd.f32 %v106, %v107
    %v110 = vtanh.pop %v108
    %v111 = vtanh.pop %v109
    %v112 = vperm.slane %v98, 0
    %v113 = vmul.f32 %v110, %v112
    %v114 = vmul.f32 %v111, %v112
    %v115 = vsel %vm39, %v113, 0.0
    %116 = vadd.xlane.f32.xlu0 %v115
    %v117 = vpop.xlane.xlu0 %116
    %v118 = vsel %vm39, %v114, 0.0
    %119 = vadd.xlane.f32.xlu0 %v118
    %v120 = vpop.xlane.xlu0 %119
    %v121 = vrot.slane %v117, 4
    %v122 = vmax.f32 %v117, %v121
    %v123 = vrot.slane %v122, 2
    %v124 = vmax.f32 %v122, %v123
    %v125 = vrot.slane %v124, 1
    %v126 = vmax.f32 %v124, %v125
    %v127 = vrot.slane %v120, 4
    %v128 = vmax.f32 %v120, %v127
    %v129 = vrot.slane %v128, 2
    %v130 = vmax.f32 %v128, %v129
    %v131 = vrot.slane %v130, 1
    %v132 = vmax.f32 %v130, %v131
    %v133 = vsub.f32 %v117, %v126
    %v134 = vsub.f32 %v120, %v132
    %v135 = vmul.f32 %v133, 1.442695
    %v136 = vpow.pop %v135
    %v137 = vmul.f32 %v134, 1.442695
    %v138 = vpow.pop %v137
    %v139 = vrot.slane %v136, 4
    %v140 = vadd.f32 %v136, %v139
    %v141 = vrot.slane %v140, 2
    %v142 = vadd.f32 %v140, %v141
    %v143 = vrot.slane %v142, 1
    %v144 = vadd.f32 %v142, %v143
    %v145 = vrot.slane %v138, 4
    %v146 = vadd.f32 %v138, %v145
    %v147 = vrot.slane %v146, 2
    %v148 = vadd.f32 %v146, %v147
    %v149 = vrot.slane %v148, 1
    %v150 = vadd.f32 %v148, %v149
    %v151 = vrcp.pop %v144
    %v152 = vmul.f32 %v144, %v151
    %v153 = vsub.f32 1.0, %v152
    %v154 = vmul.f32 %v151, %v153
    %v155 = vadd.f32 %v151, %v154
    %vm156 = vweird.f32 %v144
    %vm157 = vweird.f32 %v151
    %vm158 = vmor %vm156, %vm157
    %v159 = vsel %vm158, %v151, %v155
    %v160 = vand.u32 2147483647, %v144
    %vm161 = vcmp.eq.f32.partialorder %v160, 8.507059e+37
    %v162 = vand.u32 %v144, 2147483648
    %v163 = vor.u32 1.1754944e-38, %v162
    %v164 = vsel %vm161, %v163, %v159
    %v165 = vmul.f32 %v136, %v164
    %v166 = vrcp.pop %v150
    %v167 = vmul.f32 %v150, %v166
    %v168 = vsub.f32 1.0, %v167
    %v169 = vmul.f32 %v166, %v168
    %v170 = vadd.f32 %v166, %v169
    %vm171 = vweird.f32 %v150
    %vm172 = vweird.f32 %v166
    %vm173 = vmor %vm171, %vm172
    %v174 = vsel %vm173, %v166, %v170
    %v175 = vand.u32 2147483647, %v150
    %vm176 = vcmp.eq.f32.partialorder %v175, 8.507059e+37
    %v177 = vand.u32 %v150, 2147483648
    %v178 = vor.u32 1.1754944e-38, %v177
    %v179 = vsel %vm176, %v178, %v174
    %v180 = vmul.f32 %v138, %v179
    %v181 = vmul.f32 %v165, %v33
    %v182 = vmul.f32 %v180, %v34
    %v183 = vsel %vm39, %v181, 0.0
    %v184 = vrot.slane %v183, 4
    %v185 = vadd.f32 %v183, %v184
    %v186 = vrot.slane %v185, 2
    %v187 = vadd.f32 %v185, %v186
    %v188 = vrot.slane %v187, 1
    %v189 = vadd.f32 %v187, %v188
    %v190 = vsel %vm39, %v182, 0.0
    %v191 = vrot.slane %v190, 4
    %v192 = vadd.f32 %v190, %v191
    %v193 = vrot.slane %v192, 2
    %v194 = vadd.f32 %v192, %v193
    %v195 = vrot.slane %v194, 1
    %v196 = vadd.f32 %v194, %v195
    %v197 = vld [vmem:[%s2] sm:$0x3]
    %vm200 = vcmask 1041409
    %v201 = vsel %vm200, %v196, %v189
    %204 = vrot.lane.b32.xlu0 %v197, 32
    %v205 = vpop.permute.xlu0 %204
    %v207 = vsel %vm39, %v201, %v205
    %v208 = vld [vmem:[#allocation2 + $0x48] sm:$0xff]
    %v209 = vld [vmem:[#allocation2 + $0x50] sm:$0xff]
    %v210 = vld [vmem:[#allocation2 + $0x58] sm:$0xff]
    %v211 = vld [vmem:[#allocation2 + $0x60] sm:$0xff]
    %v212 = vld [vmem:[#allocation2 + $0x68] sm:$0xff]
    %v213 = vld [vmem:[#allocation2 + $0x70] sm:$0xff]
    %v214 = vld [vmem:[#allocation2 + $0x42] sm:$0x1]
    %v215 = vperm.slane %v214, 0
    %vm216 = vcmask 392192
    %v218 = vsel %vm216, %v207, 0
    %220 = vmatpush.msra.mxu0 0.0
    %221 = vmatpush.msra.mxu0 0.0
    %222 = vmatpush.msra.mxu0 0.0
    %223 = vmatpush.msra.mxu0 0.0
    %224 = vmatpush.msra.mxu0 0.0
    %225 = vmatpush.msra.mxu0 0.0
    %226 = vmatpush.msra.mxu0 0.0
    %227 = vmatpush.msra.mxu0 0.0
    %228 = vmatpush.msra.mxu0 0.0
    %229 = vmatpush.msra.mxu0 0.0
    %230 = vmatpush.msra.mxu0 %v213
    %231 = vmatpush.msra.mxu0 %v212
    %232 = vmatpush.msra.mxu0 %v211
    %233 = vmatpush.msra.mxu0 %v210
    %234 = vmatpush.msra.mxu0 %v209
    %235 = vmatpush.msra.mxu0 %v208
    %236 = vmatmul.f32.gmra.mxu0 %v218
    %v237 = vpop.f32.mrf.mxu0
    %v238 = vadd.f32 %v215, %v237
    %239 = vdwg.mxu0
    %v240 = vxor.u32 %v238, 2147483648
    %v241 = vmul.f32 %v240, 1.442695
    %v242 = vpow.pop %v241
    %v243 = vadd.f32 %v242, 1.0
    %v244 = vrcp.pop %v243
    %v245 = vmul.f32 %v243, %v244
    %v246 = vsub.f32 1.0, %v245
    %v247 = vmul.f32 %v244, %v246
    %v248 = vadd.f32 %v244, %v247
    %vm249 = vweird.f32 %v243
    %vm250 = vweird.f32 %v244
    %vm251 = vmor %vm249, %vm250
    %v252 = vsel %vm251, %v244, %v248
    %v253 = vand.u32 2147483647, %v243
    %vm254 = vcmp.eq.f32.partialorder %v253, 8.507059e+37
    %v255 = vand.u32 %v243, 2147483648
    %v256 = vor.u32 1.1754944e-38, %v255
    %v257 = vsel %vm254, %v256, %v252
    %v258 = vmul.f32 1.0, %v257
    %260 = vrot.lane.b32.xlu0 %v215, 32
    %v261 = vpop.permute.xlu0 %260
    %v263 = vmul.f32 %v258, %v261
    %265 = vrot.lane.b32.xlu0 %v263, 64
    %v266 = vpop.permute.xlu0 %265
    %v268 = vadd.f32 %v238, %v266
    %v269 = vtanh.pop %v268
    %v270 = vsub.f32 1.0, %v258
    %272 = vrot.lane.b32.xlu0 %v269, 96
    %v273 = vpop.permute.xlu0 %272
    %v275 = vmul.f32 %v270, %v273
    %v276 = vld [vmem:[#allocation2 + $0x78] sm:$0xff]
    %v277 = vld [vmem:[#allocation2 + $0x80] sm:$0xff]
    %v278 = vld [vmem:[#allocation2 + $0x88] sm:$0xff]
    %v279 = vld [vmem:[#allocation2 + $0x90] sm:$0xff]
    %v280 = vld [vmem:[#allocation2 + $0x43] sm:$0x1]
    %v281 = vperm.slane %v280, 0
    %283 = vrot.lane.b32.xlu0 %v275, 96
    %v284 = vpop.permute.xlu0 %283
    %v285 = vsel %vm39, %v284, 0
    %287 = vmatpush.msra.mxu0 0.0
    %288 = vmatpush.msra.mxu0 0.0
    %289 = vmatpush.msra.mxu0 0.0
    %290 = vmatpush.msra.mxu0 0.0
    %291 = vmatpush.msra.mxu0 0.0
    %292 = vmatpush.msra.mxu0 0.0
    %293 = vmatpush.msra.mxu0 0.0
    %294 = vmatpush.msra.mxu0 0.0
    %295 = vmatpush.msra.mxu0 0.0
    %296 = vmatpush.msra.mxu0 0.0
    %297 = vmatpush.msra.mxu0 0.0
    %298 = vmatpush.msra.mxu0 0.0
    %299 = vmatpush.msra.mxu0 %v279
    %300 = vmatpush.msra.mxu0 %v278
    %301 = vmatpush.msra.mxu0 %v277
    %302 = vmatpush.msra.mxu0 %v276
    %303 = vmatmul.f32.gmra.mxu0 %v285
    %v304 = vpop.f32.mrf.mxu0
    %v305 = vadd.f32 %v281, %v304
    %306 = vdwg.mxu0
    %vm307 = vcmask 123904
    %308 = vst.msk [vmem:[%s4] sm:$0x3] %vm307, %v305
    %309 = vrot.lane.b32.xlu0 %v275, 112
    %v310 = vpop.permute.xlu0 %309
    %vm312 = vcmask 386176
    %313 = vst.msk [vmem:[%s4] sm:$0x3] %vm312, %v310
    // Predicated region
    $region22: #{decoder_forward.1} parent=1 // pred_check
      _
    $region23: #{decoder_forward.1} parent=1 // pred_check_branch
      %315 = sbr.rel (0) target = $region25
    $region24: #{decoder_forward.1} parent=1 // pred_region
      _
    $region25: #{decoder_forward.1} parent=1 // pred_fallthru
      _
    // Predicated region
    $region26: #{decoder_forward.1} parent=1 // pred_check
      _
    $region27: #{decoder_forward.1} parent=1 // pred_check_branch
      %317 = sbr.rel (0) target = $region29
    $region28: #{decoder_forward.1} parent=1 // pred_region
      _
    $region29: #{decoder_forward.1} parent=1 // pred_fallthru
      _
    %318 = vsyncpa [#allocation3], 1

</llo_original>
